<compile_context>
chip_gen: v6e
topology: v6e:2x2x1
jax: 0.10.0
libtpu: 0.0.40
codegen_flags: <defaults>
</compile_context>

<pallas_src>
import functools
import math

import jax
import jax.numpy as jnp
from jax.experimental import pallas as pl
from jax.experimental.pallas import tpu as pltpu

LANES = 128
TARGET_BLOCK_BYTES = 4 * 1024 * 1024   # ~4 MiB input block per grid step
CHUNK_ROWS = 256                        # 32 f32 vregs per in-tile reduce chunk


def _round_up(x, m):
    return ((x + m - 1) // m) * m


def _is_multicore_chip():
    """True on chips with 2 TensorCores per device (v7x-class)."""
    try:
        kind = jax.devices()[0].device_kind.lower()
    except Exception:
        return False
    return ("v7" in kind) or ("7x" in kind)


_MULTICORE = _is_multicore_chip()
_GROUP_SEMANTICS = (getattr(pltpu, "CORE_PARALLEL", pltpu.PARALLEL)
                    if _MULTICORE else pltpu.PARALLEL)


def _contrib(x, op):
    """Per-element quantity to accumulate for a given loss mode."""
    if op == "sq":
        return x * x
    if op == "abs":
        return jnp.abs(x)
    return x  # op == "sum"


def _make_reduce_kernel(op, tile_rows, chunk_rows, valid_rows, num_tiles,
                        tiles_per_group, has_pad):
    """Kernel accumulating sum(contrib(x)) into a (1, 8, 128) VMEM output block."""
    n_chunks = tile_rows // chunk_rows
    needs_mask = (valid_rows % tile_rows) != 0
    # Divisor-safe partial unroll: keeps code size bounded while giving the
    # LLO scheduler visibility into the chunk bodies.
    unroll = True if n_chunks <= 16 else math.gcd(n_chunks, 8)

    def kernel(x_ref, out_ref):
        g = pl.program_id(0)
        i = pl.program_id(1)
        t = g * tiles_per_group + i           # global tile index

        # Initialize this group's resident accumulator at its first inner step.
        @pl.when(i == 0)
        def _init():
            out_ref[...] = jnp.zeros_like(out_ref)

        def reduce_tile(masked):
            def body(c, acc):
                start = pl.multiple_of(c * chunk_rows, chunk_rows)
                x = x_ref[pl.ds(start, chunk_rows), :].astype(jnp.float32)
                if masked:
                    row = (jax.lax.broadcasted_iota(jnp.int32, x.shape, 0)
                           + t * tile_rows + start)
                    # IMPORTANT: mask BEFORE _contrib so OOB garbage (possibly
                    # NaN) is replaced by 0 before being squared/abs'd/summed.
                    x = jnp.where(row < valid_rows, x, jnp.float32(0.0))
                c_val = _contrib(x, op)
                # (chunk_rows,128) -> (chunk_rows//8, 8, 128); sum over the
                # leading axis is pure vreg adds (no cross-lane movement).
                return acc + jnp.sum(c_val.reshape(-1, 8, LANES), axis=0)

            acc = jax.lax.fori_loop(0, n_chunks, body,
                                    jnp.zeros((8, LANES), jnp.float32),
                                    unroll=unroll)
            out_ref[...] += acc[None, :, :]

        if (not needs_mask) and (not has_pad):
            reduce_tile(False)
        elif needs_mask:
            last = num_tiles - 1

            @pl.when(t < last)
            def _bulk():
                reduce_tile(False)

            @pl.when(t == last)   # padded steps (t > last) contribute nothing
            def _tail():
                reduce_tile(True)
        else:
            # Uneven 2-way split only: skip the grid steps past the real tiles.
            @pl.when(t < num_tiles)
            def _bulk():
                reduce_tile(False)

    return kernel


@functools.lru_cache(maxsize=None)
def _get_reduce_call(op, rows, dtype_name):
    """Build (and cache) the pallas_call for a given op / row count / dtype."""
    dtype = jnp.dtype(dtype_name)
    itemsize = dtype.itemsize
    sub = max(8, 32 // itemsize)                          # sublane packing
    base_rows = TARGET_BLOCK_BYTES // (LANES * itemsize)  # equal-byte tiles

    if rows >= CHUNK_ROWS:
        tile_rows = min(base_rows, _round_up(rows, CHUNK_ROWS))
        chunk_rows = CHUNK_ROWS
    else:
        tile_rows = _round_up(rows, sub)
        chunk_rows = tile_rows

    num_tiles = pl.cdiv(rows, tile_rows)
    # Unconditional 2-way group split whenever there is more than one tile;
    # each group owns its own partial-output block, so this is race free and
    # lets a 2-TensorCore chip (v7x) run the groups on separate cores.
    groups = 2 if num_tiles >= 2 else 1
    tiles_per_group = pl.cdiv(num_tiles, groups)
    has_pad = (groups * tiles_per_group) != num_tiles

    kernel = _make_reduce_kernel(op, tile_rows, chunk_rows, rows, num_tiles,
                                 tiles_per_group, has_pad)

    if has_pad:
        # Clamp so padded grid steps re-read the last valid block (their
        # contribution is skipped in-kernel).
        def in_index(g, i):
            return (jnp.minimum(g * tiles_per_group + i, num_tiles - 1), 0)
    else:
        def in_index(g, i):
            return (g * tiles_per_group + i, 0)

    group_sem = _GROUP_SEMANTICS if groups == 2 else pltpu.PARALLEL

    cost = pl.CostEstimate(
        flops=3 * rows * LANES,
        transcendentals=0,
        bytes_accessed=rows * LANES * itemsize + groups * 8 * LANES * 4,
    )

    return pl.pallas_call(
        kernel,
        out_shape=jax.ShapeDtypeStruct((groups, 8, LANES), jnp.float32),
        grid_spec=pltpu.PrefetchScalarGridSpec(
            num_scalar_prefetch=0,
            grid=(groups, tiles_per_group),
            in_specs=[pl.BlockSpec((tile_rows, LANES), in_index)],
            out_specs=pl.BlockSpec((1, 8, LANES), lambda g, i: (g, 0, 0)),
        ),
        compiler_params=pltpu.CompilerParams(
            dimension_semantics=(group_sem, pltpu.ARBITRARY),
            vmem_limit_bytes=32 * 1024 * 1024),
        cost_estimate=cost,
    )


def _full_tensor_reduce(x, op):
    """sum(contrib(x, op)) over the whole tensor, accumulated in f32."""
    flat = x.reshape(-1)
    n = flat.shape[0]
    rows = n // LANES
    total = jnp.float32(0.0)
    if rows > 0:
        # For n % 128 == 0 this reshape is free (pure metadata).
        # TODO(synk): for n % 128 != 0 the prefix slice materializes one copy
        # (extra HBM pass); handle the element-granular tail in-kernel.
        mat = flat[: rows * LANES].reshape(rows, LANES)
        partials = _get_reduce_call(op, rows, mat.dtype.name)(mat)
        total = total + jnp.sum(partials)
    rem = n - rows * LANES
    if rem:
        tail = flat[rows * LANES:].astype(jnp.float32)
        total = total + jnp.sum(_contrib(tail, op))
    return total


def dream_loss_forward(x, *, loss_mode="l2", strength=100.0, mode="loss"):
    """Pallas equivalent of DreamLoss.forward.

    Returns (output, loss): output == input (pass-through), and
    loss == DreamLossMode(loss_mode)(input) * strength when mode == 'loss'.
    'capture' / 'None' modes do no numeric work on the loss path.
    """
    if mode != "loss":
        return x, jnp.float32(0.0)

    lm = loss_mode.lower()
    if lm in ("norm", "l2", "abs_l2", "mse"):
        op = "sq"
    elif lm == "mean":
        op = "sum"
    elif lm == "abs_mean":
        op = "abs"
    else:
        # TODO(synk): 'bce' (BCEWithLogitsLoss vs zero target) needs a
        # softplus accumulator; not implemented.
        raise NotImplementedError(f"loss_mode {loss_mode!r} not supported")

    total = _full_tensor_reduce(x, op)
    n = x.size

    if lm in ("norm", "l2", "abs_l2"):
        loss = jnp.sqrt(total)            # torch .norm() / sqrt(sum(x^2))
    else:                                 # 'mse', 'mean', 'abs_mean'
        loss = total / n

    return x, loss * jnp.float32(strength)


def _reference_loss(x, loss_mode, strength):
    x = x.astype(jnp.float32)
    lm = loss_mode.lower()
    if lm in ("norm", "l2", "abs_l2"):
        val = jnp.sqrt(jnp.sum(x * x))
    elif lm == "mean":
        val = jnp.mean(x)
    elif lm == "abs_mean":
        val = jnp.mean(jnp.abs(x))
    elif lm == "mse":
        val = jnp.mean(x * x)
    else:
        raise NotImplementedError(loss_mode)
    return val * strength


if __name__ == "__main__":
    strength = 100.0

    def mk(idx, shape, dtype=jnp.float32):
        k = jax.random.fold_in(jax.random.PRNGKey(0), idx)
        return jax.random.normal(k, shape, dtype=jnp.float32).astype(dtype)

    small_cases = [
        # (name, NCHW activation as a DreamLoss hook would see it)
        ("aligned_f32", mk(0, (2, 4, 16, 16))),                  # 16 rows, 1 tile
        ("unaligned_f32", mk(1, (2, 3, 15, 17))),                # mask + elem tail
        ("medium_f32", mk(2, (8, 64, 32, 32))),                  # 4096 rows, 1 tile
        ("masked_f32", mk(3, (1, 5, 253, 253))),                 # mask + elem tail
        ("aligned_bf16", mk(4, (2, 4, 16, 16), jnp.bfloat16)),   # narrow dtype
    ]
    # Larger cases exercising multi-tile grids, the 2-way group split, the
    # uneven (padded) split and the ragged-tail mask at 4 MiB block sizes.
    big_cases = [
        ("multi_tile_odd_f32", mk(5, (3, 64, 128, 128))),                  # 3 tiles
        ("multi_tile_masked_f32", mk(6, (1, 7, 600, 601))),                # 3 tiles + mask
        ("multi_tile_even_bf16", mk(7, (4, 64, 128, 128), jnp.bfloat16)),  # 2 bf16 tiles
    ]
    all_modes = ("l2", "norm", "mean", "abs_mean", "abs_l2", "mse")
    big_modes = ("l2", "mean", "abs_mean")   # covers all three accumulators

    ok = True
    for cases, modes in ((small_cases, all_modes), (big_cases, big_modes)):
        for name, x in cases:
            for lm in modes:
                out, loss = dream_loss_forward(x, loss_mode=lm,
                                               strength=strength, mode="loss")
                out = jax.block_until_ready(out)
                loss = jax.block_until_ready(loss)
                ref = _reference_loss(x, lm, strength)
                if not jnp.allclose(loss, ref, rtol=2e-4, atol=1e-4):
                    ok = False
                    print(f"MISMATCH case={name} mode={lm}: kernel={loss} ref={ref}")
                if not jnp.array_equal(out, x):
                    ok = False
                    print(f"MISMATCH case={name} mode={lm}: pass-through altered")

    if ok:
        print("KERNEL_OK")
</pallas_src>

<mosaic_0001>
module attributes {stable_mosaic.version = 11 : i64} {
  func.func @kernel(%arg0: i32, %arg1: i32, %arg2: memref<16x128xf32, #tpu.memory_space<vmem>>, %arg3: memref<1x8x128xf32, #tpu.memory_space<vmem>>) attributes {dimension_semantics = [#tpu.dimension_semantics<parallel>, #tpu.dimension_semantics<arbitrary>], iteration_bounds = array<i64: 1, 1>, scalar_prefetch = 0 : i64, scratch_operands = 0 : i64, tpu.core_type = #tpu.core_type<tc>, window_params = [{transform_indices = @transform_0, window_bounds = array<i64: 16, 128>}, {transform_indices = @transform_1, window_bounds = array<i64: 1, 8, 128>}]} {
    %c0_i32 = arith.constant 0 : i32
    %0 = arith.cmpi eq, %arg1, %c0_i32 : i32
    %1 = arith.extui %0 : i1 to i32
    %c0_i32_0 = arith.constant 0 : i32
    %2 = arith.cmpi ne, %1, %c0_i32_0 : i32
    scf.if %2 {
      %cst_9 = arith.constant 0.000000e+00 : f32
      %16 = vector.broadcast %cst_9 : f32 to vector<1x8x128xf32>
      %c0_10 = arith.constant 0 : index
      %c0_11 = arith.constant 0 : index
      %c0_12 = arith.constant 0 : index
      %17 = vector.load %arg3[%c0_10, %c0_11, %c0_12] : memref<1x8x128xf32, #tpu.memory_space<vmem>>, vector<1x8x128xf32>
      tpu.vector_store %arg3[%c0_10, %c0_11, %c0_12], %16 {strides = array<i32>} : memref<1x8x128xf32, #tpu.memory_space<vmem>>, vector<1x8x128xf32>,
    } else {
    }
    %cst = arith.constant 0.000000e+00 : f32
    %3 = vector.broadcast %cst : f32 to vector<8x128xf32>
    %c0_i32_1 = arith.constant 0 : i32
    %c16_i32 = arith.constant 16 : i32
    %4 = arith.muli %c0_i32_1, %c16_i32 : i32
    %5 = tpu.assume_multiple %4, 16 : i32
    %6 = arith.index_cast %5 : i32 to index
    %c0 = arith.constant 0 : index
    %7 = vector.load %arg2[%6, %c0] : memref<16x128xf32, #tpu.memory_space<vmem>>, vector<16x128xf32>
    %8 = arith.mulf %7, %7 : vector<16x128xf32>
    %9 = vector.shape_cast %8 : vector<16x128xf32> to vector<2x8x128xf32>
    %cst_2 = arith.constant dense<0.000000e+00> : vector<8x128xf32>
    %10 = vector.multi_reduction <add>, %9, %cst_2 [0] : vector<2x8x128xf32> to vector<8x128xf32>
    %11 = arith.addf %3, %10 : vector<8x128xf32>
    %c1_i32 = arith.constant 1 : i32
    %c0_3 = arith.constant 0 : index
    %c0_4 = arith.constant 0 : index
    %c0_5 = arith.constant 0 : index
    %12 = vector.load %arg3[%c0_3, %c0_4, %c0_5] : memref<1x8x128xf32, #tpu.memory_space<vmem>>, vector<1x8x128xf32>
    %13 = vector.shape_cast %11 : vector<8x128xf32> to vector<1x8x128xf32>
    %14 = arith.addf %12, %13 : vector<1x8x128xf32>
    %c0_6 = arith.constant 0 : index
    %c0_7 = arith.constant 0 : index
    %c0_8 = arith.constant 0 : index
    %15 = vector.load %arg3[%c0_6, %c0_7, %c0_8] : memref<1x8x128xf32, #tpu.memory_space<vmem>>, vector<1x8x128xf32>
    tpu.vector_store %arg3[%c0_6, %c0_7, %c0_8], %14 {strides = array<i32>} : memref<1x8x128xf32, #tpu.memory_space<vmem>>, vector<1x8x128xf32>,
    return
  }
  func.func @transform_0(%arg0: i32, %arg1: i32) -> (i32, i32) {
    %c1_i32 = arith.constant 1 : i32
    %0 = arith.muli %arg0, %c1_i32 : i32
    %1 = arith.addi %0, %arg1 : i32
    %c0_i32 = arith.constant 0 : i32
    %c0_i32_0 = arith.constant 0 : i32
    return %1, %c0_i32 : i32, i32
  }
  func.func @transform_1(%arg0: i32, %arg1: i32) -> (i32, i32, i32) {
    %c0_i32 = arith.constant 0 : i32
    %c0_i32_0 = arith.constant 0 : i32
    %c0_i32_1 = arith.constant 0 : i32
    return %arg0, %c0_i32, %c0_i32_0 : i32, i32, i32
  }
}

</mosaic_0001>

<llo_original>
// kernel: tpu_custom_call.1
$region0: #{tpu_custom_call.1}
  #allocation0 [shape = 'u32[]', space=smem, size = 0x4, offset = 0x4, fixed_abs, tag = 'smem constant byte address 0x4 - core index']
  #allocation1 [shape = 'u32[144,128]{1,0:T(1,128)}', space=vmem, size = 0x12000, scoped, tag = 'internal scratch']
  %s0 = inlined_call_operand.hbm [shape: f32[16,128], index: 0, kind: input, shape index: {}]
  %s1 = inlined_call_operand.hbm [shape: f32[1,8,128], index: 1, kind: output, shape index: {}]
  %s2 = sld [smem:[#allocation0]]
  $region22: #{tpu_custom_call.1} parent=0
    _
  %s4 = ssub.s32 1, %s2
  %s5 = scalar_select 0, %s4, %s2
  $region1: #{tpu_custom_call.1} parent=0
    #allocation2 [shape = 'u8[8192]{0}', space=vmem, size = 0x2000, scoped, tag = 'input window, operand 0, single buffered']
    #allocation3 [shape = 's32[1]{0}', space=sflag, size = 0x4, scoped, tag = 'scoped memory for tpu_custom_call.1']
    #allocation4 [shape = 's32[1]{0}', space=sflag, size = 0x4, scoped, tag = 'scoped memory for tpu_custom_call.1']
    #allocation5 [shape = 'u8[4096]{0}', space=vmem, size = 0x1000, scoped, tag = 'output window, operand 0, single buffered']
    %6 = vsyncpa [#allocation3], 0
    %7 = vsyncpa [#allocation4], 0
    // Predicated region
    $region2: #{tpu_custom_call.1} parent=1 // pred_check
      _
    $region3: #{tpu_custom_call.1} parent=1 // pred_check_branch
      %9 = sbr.rel (0) target = $region5
    $region4: #{tpu_custom_call.1} parent=1 // pred_region
      %s10 = sadd.s32 0, 0
      %s11 = smul.u32 2, %s10
      %s13 = ssub.s32 256, 256
      %14 = vsyncadd [#allocation3], %s13
      %s15 = smul.addr %s11, 128
      %s16 = scalar_lea.hbm %s0, %s15
      %s17 = sshll.u32 [#allocation2], 4
      %s18 = int_to_ptr.vmem [resolvable:$true] %s17
      %23 = dma.hbm_to_vmem [thread:$0]  %s16, 256, %s18, [#allocation3], 128, 128, 8
    $region5: #{tpu_custom_call.1} parent=1 // pred_fallthru
      _
    // Predicated region
    $region6: #{tpu_custom_call.1} parent=1 // pred_check
      _
    $region7: #{tpu_custom_call.1} parent=1 // pred_check_branch
      %25 = sbr.rel (0) target = $region9
    $region8: #{tpu_custom_call.1} parent=1 // pred_region
      %26 = dma.done [#allocation3], 256
    $region9: #{tpu_custom_call.1} parent=1 // pred_fallthru
      _
    %s27 = sadd.s32 0, 0
    %s28 = smul.u32 2, %s27
    %p29 = scmp.eq.s32.totalorder 0, 0
    // Predicated region
    $region10: #{tpu_custom_call.1} parent=1 // pred_check
      %p30 = pneg %p29
    $region11: #{tpu_custom_call.1} parent=1 // pred_check_branch
      %32 = sbr.rel (%p30) target = $region13
    $region12: #{tpu_custom_call.1} parent=1 // pred_region
      %33 = vst [vmem:[#allocation5] sm:$0xff] 0.0
    $region13: #{tpu_custom_call.1} parent=1 // pred_fallthru
      _
    %v34 = vld [vmem:[#allocation2] sm:$0xff]
    %v35 = vld [vmem:[#allocation2 + $0x8] sm:$0xff]
    %v36 = vmul.f32 %v34, %v34
    %v37 = vmul.f32 %v35, %v35
    %v38 = vadd.f32 %v36, %v37
    %v39 = vadd.f32 %v38, 0.0
    %v40 = vld [vmem:[#allocation5] sm:$0xff]
    %v41 = vadd.f32 %v40, %v39
    %42 = vst [vmem:[#allocation5] sm:$0xff] %v41
    // Predicated region
    $region14: #{tpu_custom_call.1} parent=1 // pred_check
      _
    $region15: #{tpu_custom_call.1} parent=1 // pred_check_branch
      %44 = sbr.rel (0) target = $region17
    $region16: #{tpu_custom_call.1} parent=1 // pred_region
      %s46 = ssub.s32 128, 128
      %47 = vsyncadd [#allocation4], %s46
      %s49 = sshll.u32 [#allocation5], 4
      %s50 = int_to_ptr.vmem [resolvable:$true] %s49
      %52 = dma.vmem_to_hbm [thread:$0]  %s50, 128, %s1, [#allocation4]
    $region17: #{tpu_custom_call.1} parent=1 // pred_fallthru
      _
    // Predicated region
    $region18: #{tpu_custom_call.1} parent=1 // pred_check
      _
    $region19: #{tpu_custom_call.1} parent=1 // pred_check_branch
      %54 = sbr.rel (0) target = $region21
    $region20: #{tpu_custom_call.1} parent=1 // pred_region
      %55 = dma.done [#allocation4], 128
    $region21: #{tpu_custom_call.1} parent=1 // pred_fallthru
      _
    %56 = vsyncpa [#allocation3], 1
    %57 = vsyncpa [#allocation4], 1

</llo_original>
